<compile_context>
chip_gen: v7x
topology: tpu7x:2x2x1
jax: 0.10.0
libtpu: 0.0.40
codegen_flags: <defaults>
</compile_context>

<pallas_src>
from functools import partial

import jax
import jax.numpy as jnp
from jax.experimental import pallas as pl
from jax.experimental.pallas import tpu as pltpu


def _round_up(x, m):
    return ((x + m - 1) // m) * m


def fwfm_kernel(e_ref, m_ref, wlin_ref, b_ref, o_ref):
    """One batch tile of the FwFM forward.

    e_ref:    (TB, FD) bf16 - flattened field embeddings (field-major lanes)
    m_ref:    (FD, FD) f32  - pair-mixing matrix (resident across the grid)
    wlin_ref: (1,  FD) f32  - linear projection weights as a lane row
    b_ref:    (1,  1)  f32  - interaction bias, in SMEM
    o_ref:    (TB, 1)  f32  - sigmoid output
    """
    e = e_ref[...].astype(jnp.float32)                   # VPU upcast (v5e-safe)
    mixed = jnp.dot(e, m_ref[...],
                    preferred_element_type=jnp.float32)  # (TB, FD) on the MXU
    # poly2 (sans bias) + linear fused into a single lane reduction.
    pre = jnp.sum(e * (mixed + wlin_ref[...]), axis=-1, keepdims=True)  # (TB,1)
    o_ref[...] = jax.nn.sigmoid(pre + b_ref[0, 0])


@partial(jax.jit, static_argnames=("num_fields", "embed_dim", "block_b"))
def fwfm_forward(x_idx, emb_table, offsets, w_int, b_int, w_lin,
                 num_fields, embed_dim, block_b=1024):
    """x_idx: (B, F) int32 feature indices per field."""
    F, D = num_fields, embed_dim
    FD = F * D
    B = x_idx.shape[0]

    # ---- glue: embedding gather, in bf16 to halve HBM traffic into the kernel.
    # TODO(synk): fuse the gather into the kernel (scalar-prefetch indices +
    # manual DMA from an HBM-resident table) to drop this HBM round trip.
    idx = x_idx + offsets[None, :]                              # (B, F)
    e = jnp.take(emb_table.astype(jnp.bfloat16), idx, axis=0)   # (B, F, D)
    e_flat = e.reshape(B, FD)

    # ---- pair-mixing matrix: M[f*D+d, g*D+d] = w_int[pair(f,g)], f < g,
    # strictly upper triangular so each field pair is counted exactly once,
    # in the same order as the PyTorch row/col loop.
    w_pairs = jnp.zeros((F, F), jnp.float32)
    k = 0
    for i in range(F - 1):
        for j in range(i + 1, F):
            w_pairs = w_pairs.at[i, j].set(w_int[k, 0])
            k += 1
    mix = jnp.kron(w_pairs, jnp.eye(D, dtype=jnp.float32))      # (FD, FD)
    w_lin_row = w_lin.reshape(1, FD).astype(jnp.float32)        # (1, FD)
    b = b_int.reshape(1, 1).astype(jnp.float32)                 # (1, 1)

    # ---- batch tiling: multiple of 16 sublanes (bf16 packing), big tiles for
    # pipelining; pad B so the grid divides evenly (padded rows are discarded).
    tb = min(block_b, _round_up(B, 16))
    tb = _round_up(tb, 16)
    b_pad = _round_up(B, tb)
    if b_pad != B:
        e_flat = jnp.pad(e_flat, ((0, b_pad - B), (0, 0)))

    out = pl.pallas_call(
        fwfm_kernel,
        out_shape=jax.ShapeDtypeStruct((b_pad, 1), jnp.float32),
        grid=(b_pad // tb,),
        in_specs=[
            pl.BlockSpec((tb, FD), lambda i: (i, 0)),   # streamed batch tile
            pl.BlockSpec((FD, FD), lambda i: (0, 0)),   # resident mixing matrix
            pl.BlockSpec((1, FD), lambda i: (0, 0)),    # resident linear row
            pl.BlockSpec(memory_space=pltpu.MemorySpace.SMEM),  # scalar bias
        ],
        out_specs=pl.BlockSpec((tb, 1), lambda i: (i, 0)),
        compiler_params=pltpu.CompilerParams(
            dimension_semantics=("parallel",),          # megacore on v7x
            vmem_limit_bytes=32 * 1024 * 1024),
    )(e_flat, mix, w_lin_row, b)
    return out[:B, 0]                                   # (B,) == x.squeeze(1)


def fwfm_reference(x_idx, emb_table, offsets, w_int, b_int, w_lin,
                   num_fields, embed_dim):
    """Pure-JAX f32 reference mirroring the PyTorch forward."""
    idx = x_idx + offsets[None, :]
    e = jnp.take(emb_table, idx, axis=0)                # (B, F, D)
    row, col = [], []
    for i in range(num_fields - 1):
        for j in range(i + 1, num_fields):
            row.append(i)
            col.append(j)
    ipv = jnp.sum(e[:, row] * e[:, col], axis=2)        # (B, P)
    poly2 = ipv @ w_int + b_int                         # (B, 1)
    linear = e.reshape(e.shape[0], -1) @ w_lin          # (B, 1)
    return jax.nn.sigmoid((poly2 + linear)[:, 0])


if __name__ == "__main__":
    # Small synthetic config consistent with FwFM(field_dims, embed_dim).
    field_dims = [10, 20, 30, 40]
    embed_dim = 16
    num_fields = len(field_dims)
    batch = 8
    total_vocab = sum(field_dims)
    interact_dim = num_fields * (num_fields - 1) // 2
    embed_output_dim = num_fields * embed_dim

    key = jax.random.PRNGKey(0)
    k_emb, k_wint, k_bint, k_wlin, k_x = jax.random.split(key, 5)

    emb_table = jax.random.uniform(
        k_emb, (total_vocab, embed_dim), jnp.float32, -0.1, 0.1)
    # interaction_weight: Linear(interact_dim, 1) -> (P, 1) weight + (1, 1) bias
    w_int = jax.random.uniform(
        k_wint, (interact_dim, 1), jnp.float32, -0.3, 0.3)
    b_int = jax.random.uniform(k_bint, (1, 1), jnp.float32, -0.3, 0.3)
    # linear_weight_layer: Linear(F*D, 1, bias=False) -> (F*D, 1)
    w_lin = jax.random.uniform(
        k_wlin, (embed_output_dim, 1), jnp.float32, -0.1, 0.1)

    # Per-field offsets: (0, cumsum(field_dims)[:-1])
    offsets = jnp.array(
        [0] + list(jnp.cumsum(jnp.array(field_dims))[:-1]), dtype=jnp.int32)

    # Input: (B, F) categorical indices, each within its field's cardinality.
    x_idx = jnp.stack(
        [jax.random.randint(jax.random.fold_in(k_x, f), (batch,), 0,
                            field_dims[f], dtype=jnp.int32)
         for f in range(num_fields)], axis=1)

    # bf16 embedding streaming -> loosened tolerance vs. the f32 reference.
    out = fwfm_forward(x_idx, emb_table, offsets, w_int, b_int, w_lin,
                       num_fields, embed_dim)
    out = jax.block_until_ready(out)
    ref = fwfm_reference(x_idx, emb_table, offsets, w_int, b_int, w_lin,
                         num_fields, embed_dim)
    assert out.shape == (batch,)
    assert jnp.allclose(out, ref, atol=1e-2, rtol=1e-2), (out, ref)

    # Second check: exercise the multi-tile grid + batch-padding path.
    batch2 = 40
    x_idx2 = jnp.stack(
        [jax.random.randint(jax.random.fold_in(k_x, 100 + f), (batch2,), 0,
                            field_dims[f], dtype=jnp.int32)
         for f in range(num_fields)], axis=1)
    out2 = jax.block_until_ready(
        fwfm_forward(x_idx2, emb_table, offsets, w_int, b_int, w_lin,
                     num_fields, embed_dim, block_b=16))
    ref2 = fwfm_reference(x_idx2, emb_table, offsets, w_int, b_int, w_lin,
                          num_fields, embed_dim)
    assert out2.shape == (batch2,)
    assert jnp.allclose(out2, ref2, atol=1e-2, rtol=1e-2), (out2, ref2)

    print("KERNEL_OK")
</pallas_src>

<mosaic_0001>
module attributes {stable_mosaic.version = 11 : i64} {
  func.func @fwfm_kernel(%arg0: i32, %arg1: memref<16x64xbf16, #tpu.memory_space<vmem>>, %arg2: memref<64x64xf32, #tpu.memory_space<vmem>>, %arg3: memref<1x64xf32, #tpu.memory_space<vmem>>, %arg4: memref<1x1xf32, #tpu.memory_space<smem>>, %arg5: memref<16x1xf32, #tpu.memory_space<vmem>>) attributes {dimension_semantics = [#tpu.dimension_semantics<parallel>], iteration_bounds = array<i64: 1>, scalar_prefetch = 0 : i64, scratch_operands = 0 : i64, tpu.core_type = #tpu.core_type<tc>, window_params = [{transform_indices = @transform_0, window_bounds = array<i64: 16, 64>}, {pipeline_mode = #tpu.pipeline_mode<synchronous>, transform_indices = @transform_1, window_bounds = array<i64: 64, 64>}, {pipeline_mode = #tpu.pipeline_mode<synchronous>, transform_indices = @transform_2, window_bounds = array<i64: 1, 64>}, {transform_indices = @transform_3, window_bounds = array<i64: 1, 1>}, {transform_indices = @transform_4, window_bounds = array<i64: 16, 1>}]} {
    %c0 = arith.constant 0 : index
    %c0_0 = arith.constant 0 : index
    %0 = vector.load %arg1[%c0, %c0_0] : memref<16x64xbf16, #tpu.memory_space<vmem>>, vector<16x64xbf16>
    %1 = arith.extf %0 : vector<16x64xbf16> to vector<16x64xf32>
    %c0_1 = arith.constant 0 : index
    %c0_2 = arith.constant 0 : index
    %2 = vector.load %arg2[%c0_1, %c0_2] : memref<64x64xf32, #tpu.memory_space<vmem>>, vector<64x64xf32>
    %cst = arith.constant dense<0.000000e+00> : vector<16x64xf32>
    %3 = tpu.matmul %1, %2, %cst {dimension_numbers = #tpu.dot_dimension_numbers<[1], [0], [0], [1], [0, 0, 1, 1], [], []>} : vector<16x64xf32>, vector<64x64xf32>, vector<16x64xf32> -> vector<16x64xf32>
    %c0_3 = arith.constant 0 : index
    %c0_4 = arith.constant 0 : index
    %4 = vector.load %arg3[%c0_3, %c0_4] : memref<1x64xf32, #tpu.memory_space<vmem>>, vector<1x64xf32>
    %5 = vector.broadcast %4 : vector<1x64xf32> to vector<16x64xf32>
    %6 = arith.addf %3, %5 : vector<16x64xf32>
    %7 = arith.mulf %1, %6 : vector<16x64xf32>
    %cst_5 = arith.constant dense<0.000000e+00> : vector<16xf32>
    %8 = vector.multi_reduction <add>, %7, %cst_5 [1] : vector<16x64xf32> to vector<16xf32>
    %9 = vector.shape_cast %8 : vector<16xf32> to vector<16x1xf32>
    %c0_6 = arith.constant 0 : index
    %c0_7 = arith.constant 0 : index
    %10 = memref.load %arg4[%c0_6, %c0_7] : memref<1x1xf32, #tpu.memory_space<smem>>
    %11 = vector.broadcast %10 : f32 to vector<16x1xf32>
    %12 = arith.addf %9, %11 : vector<16x1xf32>
    %13 = arith.negf %12 : vector<16x1xf32>
    %14 = math.exp %13 : vector<16x1xf32>
    %cst_8 = arith.constant 1.000000e+00 : f32
    %15 = vector.broadcast %cst_8 : f32 to vector<16x1xf32>
    %16 = arith.addf %15, %14 : vector<16x1xf32>
    %17 = arith.divf %15, %16 : vector<16x1xf32>
    %c0_9 = arith.constant 0 : index
    %c0_10 = arith.constant 0 : index
    %18 = vector.load %arg5[%c0_9, %c0_10] : memref<16x1xf32, #tpu.memory_space<vmem>>, vector<16x1xf32>
    tpu.vector_store %arg5[%c0_9, %c0_10], %17 {strides = array<i32>} : memref<16x1xf32, #tpu.memory_space<vmem>>, vector<16x1xf32>,
    return
  }
  func.func @transform_0(%arg0: i32) -> (i32, i32) {
    %c0_i32 = arith.constant 0 : i32
    %c0_i32_0 = arith.constant 0 : i32
    return %arg0, %c0_i32 : i32, i32
  }
  func.func @transform_1(%arg0: i32) -> (i32, i32) {
    %c0_i32 = arith.constant 0 : i32
    %c0_i32_0 = arith.constant 0 : i32
    %c0_i32_1 = arith.constant 0 : i32
    return %c0_i32, %c0_i32_0 : i32, i32
  }
  func.func @transform_2(%arg0: i32) -> (i32, i32) {
    %c0_i32 = arith.constant 0 : i32
    %c0_i32_0 = arith.constant 0 : i32
    %c0_i32_1 = arith.constant 0 : i32
    return %c0_i32, %c0_i32_0 : i32, i32
  }
  func.func @transform_3(%arg0: i32) -> (i32, i32) {
    %c0_i32 = arith.constant 0 : i32
    %c0_i32_0 = arith.constant 0 : i32
    %c0_i32_1 = arith.constant 0 : i32
    return %c0_i32, %c0_i32_0 : i32, i32
  }
  func.func @transform_4(%arg0: i32) -> (i32, i32) {
    %c0_i32 = arith.constant 0 : i32
    %c0_i32_0 = arith.constant 0 : i32
    return %arg0, %c0_i32 : i32, i32
  }
}

</mosaic_0001>

<llo_original>
// kernel: fwfm_forward.1
$region0: #{fwfm_forward.1}
  #allocation0 [shape = 'u32[]', space=smem, size = 0x4, offset = 0x4, fixed_abs, tag = 'smem constant byte address 0x4 - core index']
  #allocation1 [shape = 'u32[144,128]{1,0:T(1,128)}', space=vmem, size = 0x12000, scoped, tag = 'internal scratch']
  #allocation2 [shape = 'f32[1,1]{1,0:T(1,128)S(6)}', space=smem, size = 0x200, scoped, tag = 'scoped memory for fwfm_forward.1']
  %s0 = inlined_call_operand.vmem [shape: bf16[16,64], index: 0, kind: input, shape index: {}]
  %s1 = inlined_call_operand.vmem [shape: f32[64,64], index: 1, kind: input, shape index: {}]
  %s2 = inlined_call_operand.vmem [shape: f32[1,64], index: 2, kind: input, shape index: {}]
  %s3 = inlined_call_operand.<no memory space> [shape: f32[1,1], index: 3, kind: input, shape index: {}]
  %s4 = inlined_call_operand.vmem [shape: f32[16,1], index: 4, kind: output, shape index: {}]
  %s5 = sld [smem:[#allocation0]]
  $region26: #{fwfm_forward.1} parent=0
    _
  %s7 = ssub.s32 1, %s5
  %s8 = scalar_select 0, %s7, %s5
  %9 = sst [smem:[#allocation2]] %s3
  // Predicated region
  $region2: #{fwfm_forward.1} parent=0 // pred_check
    _
  $region3: #{fwfm_forward.1} parent=0 // pred_check_branch
    %11 = sbr.rel (0) target = $region5
  $region4: #{fwfm_forward.1} parent=0 // pred_region
    _
  $region5: #{fwfm_forward.1} parent=0 // pred_fallthru
    _
  // Predicated region
  $region6: #{fwfm_forward.1} parent=0 // pred_check
    _
  $region7: #{fwfm_forward.1} parent=0 // pred_check_branch
    %13 = sbr.rel (0) target = $region9
  $region8: #{fwfm_forward.1} parent=0 // pred_region
    _
  $region9: #{fwfm_forward.1} parent=0 // pred_fallthru
    _
  // Predicated region
  $region10: #{fwfm_forward.1} parent=0 // pred_check
    _
  $region11: #{fwfm_forward.1} parent=0 // pred_check_branch
    %15 = sbr.rel (0) target = $region13
  $region12: #{fwfm_forward.1} parent=0 // pred_region
    _
  $region13: #{fwfm_forward.1} parent=0 // pred_fallthru
    _
  // Predicated region
  $region14: #{fwfm_forward.1} parent=0 // pred_check
    _
  $region15: #{fwfm_forward.1} parent=0 // pred_check_branch
    %17 = sbr.rel (0) target = $region17
  $region16: #{fwfm_forward.1} parent=0 // pred_region
    _
  $region17: #{fwfm_forward.1} parent=0 // pred_fallthru
    _
  %v18 = vld [vmem:[%s0] sm:$0xf]
  %v19 = vld [vmem:[%s0 + $0x4] sm:$0xf]
  %v20 = vunpack.c.l.bf16 %v18
  %v21 = vunpack.c.l.bf16 %v19
  %v22 = vld [vmem:[%s1] sm:$0xff]
  %v23 = vld [vmem:[%s1 + $0x8] sm:$0xff]
  %v24 = vld [vmem:[%s1 + $0x10] sm:$0xff]
  %v25 = vld [vmem:[%s1 + $0x18] sm:$0xff]
  %v26 = vld [vmem:[%s1 + $0x20] sm:$0xff]
  %v27 = vld [vmem:[%s1 + $0x28] sm:$0xff]
  %v28 = vld [vmem:[%s1 + $0x30] sm:$0xff]
  %v29 = vld [vmem:[%s1 + $0x38] sm:$0xff]
  %v30 = vld [vmem:[%s2] sm:$0x1]
  %v32 = vlaneseq
  %v33 = vshrl.u32 %v32, 7
  %v34 = vsub.s32 0, %v33
  %v35 = vrot.slane %v30, %v34
  %vm37 = vcmask 523264
  %v39 = vsel %vm37, %v20, 0
  %v42 = vsel %vm37, %v21, 0
  %44 = vmatprep.subr.mxu0 0.0
  %45 = vmatpush1.msra.mxu0 %v22
  %46 = vmatprep.subr.mxu0 0.0
  %47 = vmatpush1.msra.mxu0 %v23
  %48 = vmatprep.subr.mxu0 0.0
  %49 = vmatpush1.msra.mxu0 %v24
  %50 = vmatprep.subr.mxu0 0.0
  %51 = vmatpush1.msra.mxu0 %v25
  %52 = vmatprep.subr.mxu0 0.0
  %53 = vmatpush1.msra.mxu0 %v26
  %54 = vmatprep.subr.mxu0 0.0
  %55 = vmatpush1.msra.mxu0 %v27
  %56 = vmatprep.subr.mxu0 0.0
  %57 = vmatpush1.msra.mxu0 %v28
  %58 = vmatprep.subr.mxu0 0.0
  %59 = vmatpush1.msra.mxu0 %v29
  %60 = vmatprep.subr.mxu0 0.0
  %61 = vmatpush1.msra.mxu0 0.0
  %62 = vmatprep.subr.mxu0 0.0
  %63 = vmatpush1.msra.mxu0 0.0
  %64 = vmatprep.subr.mxu0 0.0
  %65 = vmatpush1.msra.mxu0 0.0
  %66 = vmatprep.subr.mxu0 0.0
  %67 = vmatpush1.msra.mxu0 0.0
  %68 = vmatprep.subr.mxu0 0.0
  %69 = vmatpush1.msra.mxu0 0.0
  %70 = vmatprep.subr.mxu0 0.0
  %71 = vmatpush1.msra.mxu0 0.0
  %72 = vmatprep.subr.mxu0 0.0
  %73 = vmatpush1.msra.mxu0 0.0
  %74 = vmatprep.subr.mxu0 0.0
  %75 = vmatpush1.msra.mxu0 0.0
  %76 = vmatprep.subr.mxu0 0.0
  %77 = vmatpush1.msra.mxu0 0.0
  %78 = vmatprep.subr.mxu0 0.0
  %79 = vmatpush1.msra.mxu0 0.0
  %80 = vmatprep.subr.mxu0 0.0
  %81 = vmatpush1.msra.mxu0 0.0
  %82 = vmatprep.subr.mxu0 0.0
  %83 = vmatpush1.msra.mxu0 0.0
  %84 = vmatprep.subr.mxu0 0.0
  %85 = vmatpush1.msra.mxu0 0.0
  %86 = vmatprep.subr.mxu0 0.0
  %87 = vmatpush1.msra.mxu0 0.0
  %88 = vmatprep.subr.mxu0 0.0
  %89 = vmatpush1.msra.mxu0 0.0
  %90 = vmatprep.subr.mxu0 0.0
  %91 = vmatpush1.msra.mxu0 0.0
  %92 = vmatprep.subr.mxu0 0.0
  %93 = vmatpush1.msra.mxu0 0.0
  %94 = vmatprep.subr.mxu0 0.0
  %95 = vmatpush1.msra.mxu0 0.0
  %96 = vmatprep.subr.mxu0 0.0
  %97 = vmatpush1.msra.mxu0 0.0
  %98 = vmatprep.subr.mxu0 0.0
  %99 = vmatpush1.msra.mxu0 0.0
  %100 = vmatprep.subr.mxu0 0.0
  %101 = vmatpush1.msra.mxu0 0.0
  %102 = vmatprep.subr.mxu0 0.0
  %103 = vmatpush1.msra.mxu0 0.0
  %104 = vmatprep.subr.mxu0 0.0
  %105 = vmatpush1.msra.mxu0 0.0
  %106 = vmatprep.subr.mxu0 0.0
  %107 = vmatpush1.msra.mxu0 0.0
  %108 = vmatprep.mubr.f32.mxu0 0.0
  %109 = vmatmul.mubr.f32.gmra.mrb[0].mxu0 %v39
  %v110 = vpop.f32.mrb[0].mxu0
  %v111 = vadd.f32 %v35, %v110
  %v112 = vpop.f32.mrb[0].mxu0
  %113 = vmatprep.mubr.f32.mxu0 0.0
  %114 = vmatmul.mubr.f32.gmra.mrb[0].mxu0 %v42
  %v115 = vpop.f32.mrb[0].mxu0
  %v116 = vadd.f32 %v35, %v115
  %v117 = vpop.f32.mrb[0].mxu0
  %118 = vdwg.mxu0
  %v119 = vmul.f32 %v20, %v111
  %v120 = vmul.f32 %v21, %v116
  %v121 = vsel %vm37, %v119, 0.0
  %122 = vadd.xlane.f32.xlu0 %v121
  %v123 = vpop.xlane.xlu0 %122
  %v124 = vsel %vm37, %v120, 0.0
  %125 = vadd.xlane.f32.xlu0 %v124
  %v126 = vpop.xlane.xlu0 %125
  %s127 = sld [smem:[#allocation2]]
  %v128 = vstv %s127
  %v129 = vadd.f32 %v123, %v128
  %v130 = vadd.f32 %v126, %v128
  %v131 = vxor.u32 %v129, 2147483648
  %v132 = vxor.u32 %v130, 2147483648
  %v133 = vmul.f32 %v131, 1.442695
  %v134 = vpow.pop %v133
  %v135 = vmul.f32 %v132, 1.442695
  %v136 = vpow.pop %v135
  %v137 = vadd.f32 %v134, 1.0
  %v138 = vadd.f32 %v136, 1.0
  %v139 = vrcp.pop %v137
  %v140 = vmul.f32 1.0, %v139
  %v141 = vrcp.pop %v138
  %v142 = vmul.f32 1.0, %v141
  %vm143 = vcmask 7168
  %144 = vst.msk [vmem:[%s4] sm:$0xff] %vm143, %v140
  %145 = vst.msk [vmem:[%s4 + $0x8] sm:$0xff] %vm143, %v142
  // Predicated region
  $region18: #{fwfm_forward.1} parent=0 // pred_check
    _
  $region19: #{fwfm_forward.1} parent=0 // pred_check_branch
    %147 = sbr.rel (0) target = $region21
  $region20: #{fwfm_forward.1} parent=0 // pred_region
    _
  $region21: #{fwfm_forward.1} parent=0 // pred_fallthru
    _
  // Predicated region
  $region22: #{fwfm_forward.1} parent=0 // pred_check
    _
  $region23: #{fwfm_forward.1} parent=0 // pred_check_branch
    %149 = sbr.rel (0) target = $region25
  $region24: #{fwfm_forward.1} parent=0 // pred_region
    _
  $region25: #{fwfm_forward.1} parent=0 // pred_fallthru
    _

</llo_original>
